<compile_context>
chip_gen: v6e
topology: v6e:2x2x1
jax: 0.10.0
libtpu: 0.0.40
codegen_flags: <defaults>
</compile_context>

<pallas_src>
import jax
import jax.numpy as jnp
from jax.experimental import pallas as pl
from jax.experimental.pallas import tpu as pltpu


_BATCH_GRAIN = 16     # bf16 sublane packing: keep batch tiles 16-row aligned
_TILE_CAP = 1024      # per review: 1024-2048 amortizes per-step overhead,
                      # ~3 MB/step VMEM -> far under every chip's scoped default
_NEG_BIG = -1e30      # padded-action bias lanes (exp -> 0 in the softmax)


# ---------------------------------------------------------------------------
# Kernel
# ---------------------------------------------------------------------------
def _policy_mlp_kernel(x_ref,
                       w1_ref, b1_ref,
                       w2_ref, b2_ref,
                       w3_ref, b3_ref,
                       w4_ref, b4_ref,
                       o_ref):
    bf16 = jnp.bfloat16
    # x arrives as f32 (saves the wrapper-side HBM round trip); cast on the VPU.
    x = x_ref[...].astype(bf16)
    # fc1 + relu  (bf16 operands, f32 MXU accumulation)
    h = jnp.dot(x, w1_ref[...], preferred_element_type=jnp.float32)
    h = jnp.maximum(h + b1_ref[...], 0.0)
    # fc2 + relu
    h = jnp.dot(h.astype(bf16), w2_ref[...], preferred_element_type=jnp.float32)
    h = jnp.maximum(h + b2_ref[...], 0.0)
    # fc3 + relu
    h = jnp.dot(h.astype(bf16), w3_ref[...], preferred_element_type=jnp.float32)
    h = jnp.maximum(h + b3_ref[...], 0.0)
    # fc4 (lane-padded to a multiple of 128; padded weight cols are 0 and the
    # padded bias lanes are -1e30, so they vanish under the softmax below)
    logits = jnp.dot(h.astype(bf16), w4_ref[...], preferred_element_type=jnp.float32)
    logits = logits + b4_ref[...]
    # softmax over dim=1 (actions), numerically stable, all f32
    m = jnp.max(logits, axis=1, keepdims=True)
    e = jnp.exp(logits - m)
    denom = jnp.sum(e, axis=1, keepdims=True)
    # EUP approximate reciprocal + one Newton step: keeps the divide off the
    # VALU while retaining ~1e-7 relative accuracy.
    r = pl.reciprocal(denom, approx=True)
    r = r * (2.0 - denom * r)
    o_ref[...] = (e * r).astype(o_ref.dtype)


# ---------------------------------------------------------------------------
# Wrapper helpers
# ---------------------------------------------------------------------------
def _tensorcores_per_chip():
    """Best-effort per-chip TensorCore count (2 on v7x, 1 on v5e/v6e)."""
    try:
        info = pltpu.get_tpu_info()
        for name in ("tensorcores_per_chip", "num_tensorcores", "cores_per_chip"):
            v = getattr(info, name, None)
            if isinstance(v, int) and v > 0:
                return v
    except Exception:
        pass
    try:
        kind = jax.devices()[0].device_kind.lower()
        if "v7" in kind or "tpu7" in kind:
            return 2
    except Exception:
        pass
    return 1


def _default_block_b(B, tensorcores):
    """Batch tile: largest VMEM-friendly tile; split only when it pays off."""
    # Single-TensorCore chips (v5e/v6e): one full-batch tile whenever it fits
    # -> no padding, one grid step (parallel vs arbitrary is a no-op with 1 TC).
    if B <= _TILE_CAP and not (tensorcores >= 2 and B >= 2 * _BATCH_GRAIN):
        return B
    # Otherwise balance the tiles so the last step is not mostly padding.
    steps = pl.cdiv(B, _TILE_CAP)
    if tensorcores >= 2:
        steps = max(steps, 2)            # v7x: keep both TCs fed ("parallel")
    bb = pl.cdiv(pl.cdiv(B, steps), _BATCH_GRAIN) * _BATCH_GRAIN
    return max(_BATCH_GRAIN, min(bb, _TILE_CAP))


def prepare_policy_params(params):
    """One-time conversion of PyTorch-layout params for the kernel.

    Call once at init and reuse across forward calls: casts weights to bf16 and
    lane-pads fc4 (weight cols -> 0, bias lanes -> -1e30) so the softmax /
    output block is lane-dense.  params: w1..w4 (in, out), b1..b4 (1, out).
    """
    A = int(params["w4"].shape[1])
    A_pad = pl.cdiv(A, 128) * 128
    w4 = params["w4"].astype(jnp.bfloat16)
    b4 = params["b4"].astype(jnp.float32)
    if A_pad != A:
        w4 = jnp.pad(w4, ((0, 0), (0, A_pad - A)))
        b4 = jnp.pad(b4, ((0, 0), (0, A_pad - A)), constant_values=_NEG_BIG)
    return {
        "w1": params["w1"].astype(jnp.bfloat16), "b1": params["b1"].astype(jnp.float32),
        "w2": params["w2"].astype(jnp.bfloat16), "b2": params["b2"].astype(jnp.float32),
        "w3": params["w3"].astype(jnp.bfloat16), "b3": params["b3"].astype(jnp.float32),
        "w4": w4, "b4": b4,
        "num_actions": A,
    }


def policy_network_forward(x, params, *, block_b=None):
    """Pallas forward pass of PolicyNetwork.

    x: (B, input_dim) float32
    params: output of prepare_policy_params() (raw PyTorch-layout params are
            also accepted and converted on the fly).
    """
    if "num_actions" not in params:
        # Unprepared params: convert on the fly (prefer preparing once at init).
        params = prepare_policy_params(params)

    B, D = x.shape
    A = params["num_actions"]
    A_pad = params["w4"].shape[1]
    assert params["w1"].shape[0] == D, "input feature dim mismatch"

    if block_b is None:
        block_b = _default_block_b(B, _tensorcores_per_chip())
    if block_b != B:
        assert block_b % 8 == 0, \
            "block_b must equal B or be a multiple of 8 (sublane tiling)"

    # Pad the batch only when the grid actually tiles it (zero rows are exact:
    # they produce finite softmax rows that are sliced off below).
    B_pad = pl.cdiv(B, block_b) * block_b
    x_in = jnp.pad(x, ((0, B_pad - B), (0, 0))) if B_pad != B else x

    grid = (B_pad // block_b,)

    def resident(arr):
        # Weights/biases stay resident in VMEM: constant block index, and a
        # single buffer (no point double-buffering a constant operand).
        return pl.BlockSpec(arr.shape, lambda i: (0,) * arr.ndim,
                            pipeline_mode=pl.Buffered(1))

    w1, b1 = params["w1"], params["b1"]
    w2, b2 = params["w2"], params["b2"]
    w3, b3 = params["w3"], params["b3"]
    w4, b4 = params["w4"], params["b4"]

    in_specs = [
        pl.BlockSpec((block_b, D), lambda i: (i, 0)),   # x, batch-tiled, f32
        resident(w1), resident(b1),
        resident(w2), resident(b2),
        resident(w3), resident(b3),
        resident(w4), resident(b4),
    ]
    # Lane-dense output block (A_pad is a multiple of 128 -> unmasked stores).
    out_spec = pl.BlockSpec((block_b, A_pad), lambda i: (i, 0))

    out = pl.pallas_call(
        _policy_mlp_kernel,
        out_shape=jax.ShapeDtypeStruct((B_pad, A_pad), jnp.float32),
        grid_spec=pltpu.PrefetchScalarGridSpec(
            num_scalar_prefetch=0,
            grid=grid,
            in_specs=in_specs,
            out_specs=out_spec,
        ),
        compiler_params=pltpu.CompilerParams(
            dimension_semantics=("parallel",)),
    )(x_in, w1, b1, w2, b2, w3, b3, w4, b4)

    return out[:B, :A]


# ---------------------------------------------------------------------------
# Reference + init
# ---------------------------------------------------------------------------
def init_params(key, input_dim, num_actions):
    """Deterministic synthetic init (shapes match the PyTorch module)."""
    dims = [(input_dim, 256), (256, 256), (256, 128), (128, num_actions)]
    params = {}
    for idx, (fan_in, fan_out) in enumerate(dims, start=1):
        key, kw, kb = jax.random.split(key, 3)
        bound = 1.0 / jnp.sqrt(fan_in)
        params[f"w{idx}"] = jax.random.uniform(
            kw, (fan_in, fan_out), jnp.float32, minval=-bound, maxval=bound)
        params[f"b{idx}"] = jax.random.uniform(
            kb, (1, fan_out), jnp.float32, minval=-bound, maxval=bound)
    return params


def reference_forward(x, params):
    """Pure-JAX reference with the same bf16-operand / f32-accumulate recipe."""
    bf16 = jnp.bfloat16
    f32 = jnp.float32
    h = jnp.dot(x.astype(bf16), params["w1"].astype(bf16),
                preferred_element_type=f32) + params["b1"]
    h = jnp.maximum(h, 0.0)
    h = jnp.dot(h.astype(bf16), params["w2"].astype(bf16),
                preferred_element_type=f32) + params["b2"]
    h = jnp.maximum(h, 0.0)
    h = jnp.dot(h.astype(bf16), params["w3"].astype(bf16),
                preferred_element_type=f32) + params["b3"]
    h = jnp.maximum(h, 0.0)
    logits = jnp.dot(h.astype(bf16), params["w4"].astype(bf16),
                     preferred_element_type=f32) + params["b4"]
    return jax.nn.softmax(logits, axis=1)


if __name__ == "__main__":
    B = 8            # batch
    INPUT_DIM = 64   # input_shape[0]
    NUM_ACTIONS = 8

    key = jax.random.PRNGKey(0)
    kx, kp = jax.random.split(key)
    x = jax.random.normal(kx, (B, INPUT_DIM), jnp.float32)
    params = init_params(kp, INPUT_DIM, NUM_ACTIONS)

    # Convert / lane-pad the weights ONCE, reuse for every forward call.
    prepared = prepare_policy_params(params)

    out = jax.block_until_ready(policy_network_forward(x, prepared))
    ref = reference_forward(x, params)

    assert out.shape == (B, NUM_ACTIONS)
    assert jnp.allclose(out, ref, atol=1e-4, rtol=1e-4), \
        float(jnp.max(jnp.abs(out - ref)))
    assert jnp.allclose(jnp.sum(out, axis=1), 1.0, atol=1e-5)

    # Exercise the tiled + batch-padded multi-step ("parallel") grid path too,
    # independent of which chip generation we detected.
    B2 = 40
    x2 = jax.random.normal(jax.random.PRNGKey(1), (B2, INPUT_DIM), jnp.float32)
    out2 = jax.block_until_ready(
        policy_network_forward(x2, prepared, block_b=16))
    ref2 = reference_forward(x2, params)
    assert out2.shape == (B2, NUM_ACTIONS)
    assert jnp.allclose(out2, ref2, atol=1e-4, rtol=1e-4), \
        float(jnp.max(jnp.abs(out2 - ref2)))
    assert jnp.allclose(jnp.sum(out2, axis=1), 1.0, atol=1e-5)

    print("KERNEL_OK")
</pallas_src>

<mosaic_0001>
module attributes {stable_mosaic.version = 11 : i64} {
  func.func @_policy_mlp_kernel(%arg0: i32, %arg1: memref<8x64xf32, #tpu.memory_space<vmem>>, %arg2: memref<64x256xbf16, #tpu.memory_space<vmem>>, %arg3: memref<1x256xf32, #tpu.memory_space<vmem>>, %arg4: memref<256x256xbf16, #tpu.memory_space<vmem>>, %arg5: memref<1x256xf32, #tpu.memory_space<vmem>>, %arg6: memref<256x128xbf16, #tpu.memory_space<vmem>>, %arg7: memref<1x128xf32, #tpu.memory_space<vmem>>, %arg8: memref<128x128xbf16, #tpu.memory_space<vmem>>, %arg9: memref<1x128xf32, #tpu.memory_space<vmem>>, %arg10: memref<8x128xf32, #tpu.memory_space<vmem>>) attributes {dimension_semantics = [#tpu.dimension_semantics<parallel>], iteration_bounds = array<i64: 1>, scalar_prefetch = 0 : i64, scratch_operands = 0 : i64, tpu.core_type = #tpu.core_type<tc>, window_params = [{transform_indices = @transform_0, window_bounds = array<i64: 8, 64>}, {pipeline_mode = #tpu.pipeline_mode<synchronous>, transform_indices = @transform_1, window_bounds = array<i64: 64, 256>}, {pipeline_mode = #tpu.pipeline_mode<synchronous>, transform_indices = @transform_2, window_bounds = array<i64: 1, 256>}, {pipeline_mode = #tpu.pipeline_mode<synchronous>, transform_indices = @transform_3, window_bounds = array<i64: 256, 256>}, {pipeline_mode = #tpu.pipeline_mode<synchronous>, transform_indices = @transform_4, window_bounds = array<i64: 1, 256>}, {pipeline_mode = #tpu.pipeline_mode<synchronous>, transform_indices = @transform_5, window_bounds = array<i64: 256, 128>}, {pipeline_mode = #tpu.pipeline_mode<synchronous>, transform_indices = @transform_6, window_bounds = array<i64: 1, 128>}, {pipeline_mode = #tpu.pipeline_mode<synchronous>, transform_indices = @transform_7, window_bounds = array<i64: 128, 128>}, {pipeline_mode = #tpu.pipeline_mode<synchronous>, transform_indices = @transform_8, window_bounds = array<i64: 1, 128>}, {transform_indices = @transform_9, window_bounds = array<i64: 8, 128>}]} {
    %c0 = arith.constant 0 : index
    %c0_0 = arith.constant 0 : index
    %0 = vector.load %arg1[%c0, %c0_0] : memref<8x64xf32, #tpu.memory_space<vmem>>, vector<8x64xf32>
    %1 = arith.truncf %0 : vector<8x64xf32> to vector<8x64xbf16>
    %c0_1 = arith.constant 0 : index
    %c0_2 = arith.constant 0 : index
    %2 = vector.load %arg2[%c0_1, %c0_2] : memref<64x256xbf16, #tpu.memory_space<vmem>>, vector<64x256xbf16>
    %cst = arith.constant dense<0.000000e+00> : vector<8x256xf32>
    %3 = tpu.matmul %1, %2, %cst {dimension_numbers = #tpu.dot_dimension_numbers<[1], [0], [0], [1], [0, 0, 1, 1], [], []>} : vector<8x64xbf16>, vector<64x256xbf16>, vector<8x256xf32> -> vector<8x256xf32>
    %c0_3 = arith.constant 0 : index
    %c0_4 = arith.constant 0 : index
    %4 = vector.load %arg3[%c0_3, %c0_4] : memref<1x256xf32, #tpu.memory_space<vmem>>, vector<1x256xf32>
    %5 = vector.broadcast %4 : vector<1x256xf32> to vector<8x256xf32>
    %6 = arith.addf %3, %5 : vector<8x256xf32>
    %cst_5 = arith.constant 0.000000e+00 : f32
    %7 = vector.broadcast %cst_5 : f32 to vector<8x256xf32>
    %8 = arith.maximumf %6, %7 : vector<8x256xf32>
    %9 = arith.truncf %8 : vector<8x256xf32> to vector<8x256xbf16>
    %c0_6 = arith.constant 0 : index
    %c0_7 = arith.constant 0 : index
    %10 = vector.load %arg4[%c0_6, %c0_7] : memref<256x256xbf16, #tpu.memory_space<vmem>>, vector<256x256xbf16>
    %cst_8 = arith.constant dense<0.000000e+00> : vector<8x256xf32>
    %11 = tpu.matmul %9, %10, %cst_8 {dimension_numbers = #tpu.dot_dimension_numbers<[1], [0], [0], [1], [0, 0, 1, 1], [], []>} : vector<8x256xbf16>, vector<256x256xbf16>, vector<8x256xf32> -> vector<8x256xf32>
    %c0_9 = arith.constant 0 : index
    %c0_10 = arith.constant 0 : index
    %12 = vector.load %arg5[%c0_9, %c0_10] : memref<1x256xf32, #tpu.memory_space<vmem>>, vector<1x256xf32>
    %13 = vector.broadcast %12 : vector<1x256xf32> to vector<8x256xf32>
    %14 = arith.addf %11, %13 : vector<8x256xf32>
    %cst_11 = arith.constant 0.000000e+00 : f32
    %15 = vector.broadcast %cst_11 : f32 to vector<8x256xf32>
    %16 = arith.maximumf %14, %15 : vector<8x256xf32>
    %17 = arith.truncf %16 : vector<8x256xf32> to vector<8x256xbf16>
    %c0_12 = arith.constant 0 : index
    %c0_13 = arith.constant 0 : index
    %18 = vector.load %arg6[%c0_12, %c0_13] : memref<256x128xbf16, #tpu.memory_space<vmem>>, vector<256x128xbf16>
    %cst_14 = arith.constant dense<0.000000e+00> : vector<8x128xf32>
    %19 = tpu.matmul %17, %18, %cst_14 {dimension_numbers = #tpu.dot_dimension_numbers<[1], [0], [0], [1], [0, 0, 1, 1], [], []>} : vector<8x256xbf16>, vector<256x128xbf16>, vector<8x128xf32> -> vector<8x128xf32>
    %c0_15 = arith.constant 0 : index
    %c0_16 = arith.constant 0 : index
    %20 = vector.load %arg7[%c0_15, %c0_16] : memref<1x128xf32, #tpu.memory_space<vmem>>, vector<1x128xf32>
    %21 = vector.broadcast %20 : vector<1x128xf32> to vector<8x128xf32>
    %22 = arith.addf %19, %21 : vector<8x128xf32>
    %cst_17 = arith.constant 0.000000e+00 : f32
    %23 = vector.broadcast %cst_17 : f32 to vector<8x128xf32>
    %24 = arith.maximumf %22, %23 : vector<8x128xf32>
    %25 = arith.truncf %24 : vector<8x128xf32> to vector<8x128xbf16>
    %c0_18 = arith.constant 0 : index
    %c0_19 = arith.constant 0 : index
    %26 = vector.load %arg8[%c0_18, %c0_19] : memref<128x128xbf16, #tpu.memory_space<vmem>>, vector<128x128xbf16>
    %cst_20 = arith.constant dense<0.000000e+00> : vector<8x128xf32>
    %27 = tpu.matmul %25, %26, %cst_20 {dimension_numbers = #tpu.dot_dimension_numbers<[1], [0], [0], [1], [0, 0, 1, 1], [], []>} : vector<8x128xbf16>, vector<128x128xbf16>, vector<8x128xf32> -> vector<8x128xf32>
    %c0_21 = arith.constant 0 : index
    %c0_22 = arith.constant 0 : index
    %28 = vector.load %arg9[%c0_21, %c0_22] : memref<1x128xf32, #tpu.memory_space<vmem>>, vector<1x128xf32>
    %29 = vector.broadcast %28 : vector<1x128xf32> to vector<8x128xf32>
    %30 = arith.addf %27, %29 : vector<8x128xf32>
    %cst_23 = arith.constant dense<0xFF800000> : vector<8xf32>
    %31 = vector.multi_reduction <maximumf>, %30, %cst_23 [1] : vector<8x128xf32> to vector<8xf32>
    %32 = vector.shape_cast %31 : vector<8xf32> to vector<8x1xf32>
    %33 = vector.broadcast %32 : vector<8x1xf32> to vector<8x128xf32>
    %34 = arith.subf %30, %33 : vector<8x128xf32>
    %35 = math.exp %34 : vector<8x128xf32>
    %cst_24 = arith.constant dense<0.000000e+00> : vector<8xf32>
    %36 = vector.multi_reduction <add>, %35, %cst_24 [1] : vector<8x128xf32> to vector<8xf32>
    %37 = vector.shape_cast %36 : vector<8xf32> to vector<8x1xf32>
    %38 = tpu.reciprocal %37 {approx = true} : vector<8x1xf32> -> vector<8x1xf32>
    %39 = arith.mulf %37, %38 : vector<8x1xf32>
    %cst_25 = arith.constant 2.000000e+00 : f32
    %40 = vector.broadcast %cst_25 : f32 to vector<8x1xf32>
    %41 = arith.subf %40, %39 : vector<8x1xf32>
    %42 = arith.mulf %38, %41 : vector<8x1xf32>
    %43 = vector.broadcast %42 : vector<8x1xf32> to vector<8x128xf32>
    %44 = arith.mulf %35, %43 : vector<8x128xf32>
    %c0_26 = arith.constant 0 : index
    %c0_27 = arith.constant 0 : index
    %45 = vector.load %arg10[%c0_26, %c0_27] : memref<8x128xf32, #tpu.memory_space<vmem>>, vector<8x128xf32>
    tpu.vector_store %arg10[%c0_26, %c0_27], %44 {strides = array<i32>} : memref<8x128xf32, #tpu.memory_space<vmem>>, vector<8x128xf32>,
    return
  }
  func.func @transform_0(%arg0: i32) -> (i32, i32) {
    %c0_i32 = arith.constant 0 : i32
    %c0_i32_0 = arith.constant 0 : i32
    return %arg0, %c0_i32 : i32, i32
  }
  func.func @transform_1(%arg0: i32) -> (i32, i32) {
    %c0_i32 = arith.constant 0 : i32
    %c0_i32_0 = arith.constant 0 : i32
    %c0_i32_1 = arith.constant 0 : i32
    return %c0_i32, %c0_i32_0 : i32, i32
  }
  func.func @transform_2(%arg0: i32) -> (i32, i32) {
    %c0_i32 = arith.constant 0 : i32
    %c0_i32_0 = arith.constant 0 : i32
    %c0_i32_1 = arith.constant 0 : i32
    return %c0_i32, %c0_i32_0 : i32, i32
  }
  func.func @transform_3(%arg0: i32) -> (i32, i32) {
    %c0_i32 = arith.constant 0 : i32
    %c0_i32_0 = arith.constant 0 : i32
    %c0_i32_1 = arith.constant 0 : i32
    return %c0_i32, %c0_i32_0 : i32, i32
  }
  func.func @transform_4(%arg0: i32) -> (i32, i32) {
    %c0_i32 = arith.constant 0 : i32
    %c0_i32_0 = arith.constant 0 : i32
    %c0_i32_1 = arith.constant 0 : i32
    return %c0_i32, %c0_i32_0 : i32, i32
  }
  func.func @transform_5(%arg0: i32) -> (i32, i32) {
    %c0_i32 = arith.constant 0 : i32
    %c0_i32_0 = arith.constant 0 : i32
    %c0_i32_1 = arith.constant 0 : i32
    return %c0_i32, %c0_i32_0 : i32, i32
  }
  func.func @transform_6(%arg0: i32) -> (i32, i32) {
    %c0_i32 = arith.constant 0 : i32
    %c0_i32_0 = arith.constant 0 : i32
    %c0_i32_1 = arith.constant 0 : i32
    return %c0_i32, %c0_i32_0 : i32, i32
  }
  func.func @transform_7(%arg0: i32) -> (i32, i32) {
    %c0_i32 = arith.constant 0 : i32
    %c0_i32_0 = arith.constant 0 : i32
    %c0_i32_1 = arith.constant 0 : i32
    return %c0_i32, %c0_i32_0 : i32, i32
  }
  func.func @transform_8(%arg0: i32) -> (i32, i32) {
    %c0_i32 = arith.constant 0 : i32
    %c0_i32_0 = arith.constant 0 : i32
    %c0_i32_1 = arith.constant 0 : i32
    return %c0_i32, %c0_i32_0 : i32, i32
  }
  func.func @transform_9(%arg0: i32) -> (i32, i32) {
    %c0_i32 = arith.constant 0 : i32
    %c0_i32_0 = arith.constant 0 : i32
    return %arg0, %c0_i32 : i32, i32
  }
}

</mosaic_0001>

<llo_original>
// kernel: tpu_custom_call.1
$region0: #{tpu_custom_call.1}
  #allocation0 [shape = 'u32[]', space=smem, size = 0x4, offset = 0x4, fixed_abs, tag = 'smem constant byte address 0x4 - core index']
  #allocation1 [shape = 'u32[144,128]{1,0:T(1,128)}', space=vmem, size = 0x12000, scoped, tag = 'internal scratch']
  %s0 = inlined_call_operand.hbm [shape: f32[8,64], index: 0, kind: input, shape index: {}]
  %s1 = inlined_call_operand.hbm [shape: bf16[64,256], index: 1, kind: input, shape index: {}]
  %s2 = inlined_call_operand.vmem [shape: f32[1,256], index: 2, kind: input, shape index: {}]
  %s3 = inlined_call_operand.hbm [shape: bf16[256,256], index: 3, kind: input, shape index: {}]
  %s4 = inlined_call_operand.vmem [shape: f32[1,256], index: 4, kind: input, shape index: {}]
  %s5 = inlined_call_operand.hbm [shape: bf16[256,128], index: 5, kind: input, shape index: {}]
  %s6 = inlined_call_operand.vmem [shape: f32[1,128], index: 6, kind: input, shape index: {}]
  %s7 = inlined_call_operand.hbm [shape: bf16[128,128], index: 7, kind: input, shape index: {}]
  %s8 = inlined_call_operand.vmem [shape: f32[1,128], index: 8, kind: input, shape index: {}]
  %s9 = inlined_call_operand.hbm [shape: f32[8,128], index: 9, kind: output, shape index: {}]
  %s10 = sld [smem:[#allocation0]]
  $region66: #{tpu_custom_call.1} parent=0
    _
  %s12 = ssub.s32 1, %s10
  %s13 = scalar_select 0, %s12, %s10
  $region1: #{tpu_custom_call.1} parent=0
    #allocation2 [shape = 'u8[4096]{0}', space=vmem, size = 0x1000, scoped, tag = 'input window, operand 0, single buffered']
    #allocation3 [shape = 's32[1]{0}', space=sflag, size = 0x4, scoped, tag = 'scoped memory for tpu_custom_call.1']
    #allocation4 [shape = 's32[1]{0}', space=sflag, size = 0x4, scoped, tag = 'scoped memory for tpu_custom_call.1']
    #allocation5 [shape = 'u8[32768]{0}', space=vmem, size = 0x8000, scoped, tag = 'input window, operand 1, single buffered']
    #allocation6 [shape = 's32[1]{0}', space=sflag, size = 0x4, scoped, tag = 'scoped memory for tpu_custom_call.1']
    #allocation7 [shape = 'u8[131072]{0}', space=vmem, size = 0x20000, scoped, tag = 'input window, operand 3, single buffered']
    #allocation8 [shape = 'u8[65536]{0}', space=vmem, size = 0x10000, scoped, tag = 'input window, operand 5, single buffered']
    #allocation9 [shape = 's32[1]{0}', space=sflag, size = 0x4, scoped, tag = 'scoped memory for tpu_custom_call.1']
    #allocation10 [shape = 'u8[32768]{0}', space=vmem, size = 0x8000, scoped, tag = 'input window, operand 7, single buffered']
    #allocation11 [shape = 'u8[4096]{0}', space=vmem, size = 0x1000, scoped, tag = 'output window, operand 0, single buffered']
    %14 = vsyncpa [#allocation3], 0
    %15 = vsyncpa [#allocation6], 0
    %16 = vsyncpa [#allocation9], 0
    %17 = vsyncpa [#allocation4], 0
    // Predicated region
    $region2: #{tpu_custom_call.1} parent=1 // pred_check
      _
    $region3: #{tpu_custom_call.1} parent=1 // pred_check_branch
      %19 = sbr.rel (0) target = $region5
    $region4: #{tpu_custom_call.1} parent=1 // pred_region
      %s21 = ssub.s32 128, 128
      %22 = vsyncadd [#allocation3], %s21
      %s24 = sshll.u32 [#allocation2], 4
      %s25 = int_to_ptr.vmem [resolvable:$true] %s24
      %27 = dma.hbm_to_vmem [thread:$0]  %s0, 128, %s25, [#allocation3]
    $region5: #{tpu_custom_call.1} parent=1 // pred_fallthru
      _
    // Predicated region
    $region6: #{tpu_custom_call.1} parent=1 // pred_check
      _
    $region7: #{tpu_custom_call.1} parent=1 // pred_check_branch
      %29 = sbr.rel (0) target = $region9
    $region8: #{tpu_custom_call.1} parent=1 // pred_region
      %s31 = ssub.s32 1024, 1024
      %32 = vsyncadd [#allocation6], %s31
      %s33 = sshll.u32 [#allocation5], 4
      %s34 = int_to_ptr.vmem [resolvable:$true] %s33
      %39 = dma.hbm_to_vmem [thread:$0]  %s1, 1024, %s34, [#allocation6], 128, 128, 8
    $region9: #{tpu_custom_call.1} parent=1 // pred_fallthru
      _
    // Predicated region
    $region10: #{tpu_custom_call.1} parent=1 // pred_check
      _
    $region11: #{tpu_custom_call.1} parent=1 // pred_check_branch
      %41 = sbr.rel (0) target = $region13
    $region12: #{tpu_custom_call.1} parent=1 // pred_region
      _
    $region13: #{tpu_custom_call.1} parent=1 // pred_fallthru
      _
    // Predicated region
    $region14: #{tpu_custom_call.1} parent=1 // pred_check
      _
    $region15: #{tpu_custom_call.1} parent=1 // pred_check_branch
      %43 = sbr.rel (0) target = $region17
    $region16: #{tpu_custom_call.1} parent=1 // pred_region
      %s45 = ssub.s32 4096, 4096
      %46 = vsyncadd [#allocation6], %s45
      %s47 = sshll.u32 [#allocation7], 4
      %s48 = int_to_ptr.vmem [resolvable:$true] %s47
      %53 = dma.hbm_to_vmem [thread:$0]  %s3, 4096, %s48, [#allocation6], 128, 128, 8
    $region17: #{tpu_custom_call.1} parent=1 // pred_fallthru
      _
    // Predicated region
    $region18: #{tpu_custom_call.1} parent=1 // pred_check
      _
    $region19: #{tpu_custom_call.1} parent=1 // pred_check_branch
      %55 = sbr.rel (0) target = $region21
    $region20: #{tpu_custom_call.1} parent=1 // pred_region
      _
    $region21: #{tpu_custom_call.1} parent=1 // pred_fallthru
      _
    // Predicated region
    $region22: #{tpu_custom_call.1} parent=1 // pred_check
      _
    $region23: #{tpu_custom_call.1} parent=1 // pred_check_branch
      %57 = sbr.rel (0) target = $region25
    $region24: #{tpu_custom_call.1} parent=1 // pred_region
      %s59 = ssub.s32 2048, 2048
      %60 = vsyncadd [#allocation9], %s59
      %s61 = sshll.u32 [#allocation8], 4
      %s62 = int_to_ptr.vmem [resolvable:$true] %s61
      %67 = dma.hbm_to_vmem [thread:$0]  %s5, 2048, %s62, [#allocation9], 64, 64, 4
    $region25: #{tpu_custom_call.1} parent=1 // pred_fallthru
      _
    // Predicated region
    $region26: #{tpu_custom_call.1} parent=1 // pred_check
      _
    $region27: #{tpu_custom_call.1} parent=1 // pred_check_branch
      %69 = sbr.rel (0) target = $region29
    $region28: #{tpu_custom_call.1} parent=1 // pred_region
      _
    $region29: #{tpu_custom_call.1} parent=1 // pred_fallthru
      _
    // Predicated region
    $region30: #{tpu_custom_call.1} parent=1 // pred_check
      _
    $region31: #{tpu_custom_call.1} parent=1 // pred_check_branch
      %71 = sbr.rel (0) target = $region33
    $region32: #{tpu_custom_call.1} parent=1 // pred_region
      %s73 = ssub.s32 1024, 1024
      %74 = vsyncadd [#allocation9], %s73
      %s75 = sshll.u32 [#allocation10], 4
      %s76 = int_to_ptr.vmem [resolvable:$true] %s75
      %81 = dma.hbm_to_vmem [thread:$0]  %s7, 1024, %s76, [#allocation9], 64, 64, 4
    $region33: #{tpu_custom_call.1} parent=1 // pred_fallthru
      _
    // Predicated region
    $region34: #{tpu_custom_call.1} parent=1 // pred_check
      _
    $region35: #{tpu_custom_call.1} parent=1 // pred_check_branch
      %83 = sbr.rel (0) target = $region37
    $region36: #{tpu_custom_call.1} parent=1 // pred_region
      _
    $region37: #{tpu_custom_call.1} parent=1 // pred_fallthru
      _
    // Predicated region
    $region38: #{tpu_custom_call.1} parent=1 // pred_check
      _
    $region39: #{tpu_custom_call.1} parent=1 // pred_check_branch
      %85 = sbr.rel (0) target = $region41
    $region40: #{tpu_custom_call.1} parent=1 // pred_region
      %86 = dma.done [#allocation3], 128
    $region41: #{tpu_custom_call.1} parent=1 // pred_fallthru
      _
    // Predicated region
    $region42: #{tpu_custom_call.1} parent=1 // pred_check
      _
    $region43: #{tpu_custom_call.1} parent=1 // pred_check_branch
      %88 = sbr.rel (0) target = $region45
    $region44: #{tpu_custom_call.1} parent=1 // pred_region
      %89 = dma.done [#allocation6], 1024
    $region45: #{tpu_custom_call.1} parent=1 // pred_fallthru
      _
    // Predicated region
    $region46: #{tpu_custom_call.1} parent=1 // pred_check
      _
    $region47: #{tpu_custom_call.1} parent=1 // pred_check_branch
      %91 = sbr.rel (0) target = $region49
    $region48: #{tpu_custom_call.1} parent=1 // pred_region
      %92 = dma.done [#allocation6], 4096
    $region49: #{tpu_custom_call.1} parent=1 // pred_fallthru
      _
    // Predicated region
    $region50: #{tpu_custom_call.1} parent=1 // pred_check
      _
    $region51: #{tpu_custom_call.1} parent=1 // pred_check_branch
      %94 = sbr.rel (0) target = $region53
    $region52: #{tpu_custom_call.1} parent=1 // pred_region
      %95 = dma.done [#allocation9], 2048
    $region53: #{tpu_custom_call.1} parent=1 // pred_fallthru
      _
    // Predicated region
    $region54: #{tpu_custom_call.1} parent=1 // pred_check
      _
    $region55: #{tpu_custom_call.1} parent=1 // pred_check_branch
      %97 = sbr.rel (0) target = $region57
    $region56: #{tpu_custom_call.1} parent=1 // pred_region
      %98 = dma.done [#allocation9], 1024
    $region57: #{tpu_custom_call.1} parent=1 // pred_fallthru
      _
    %v100 = vld [vmem:[#allocation2] sm:$0xff]
    %v101 = vpack.c.bf16 %v100, %v100
    %v102 = vld [vmem:[#allocation5] sm:$0xff]
    %v103 = vld [vmem:[#allocation5 + $0x8] sm:$0xff]
    %v104 = vld [vmem:[#allocation5 + $0x10] sm:$0xff]
    %v105 = vld [vmem:[#allocation5 + $0x18] sm:$0xff]
    %v106 = vld [vmem:[#allocation5 + $0x20] sm:$0xff]
    %v107 = vld [vmem:[#allocation5 + $0x28] sm:$0xff]
    %v108 = vld [vmem:[#allocation5 + $0x30] sm:$0xff]
    %v109 = vld [vmem:[#allocation5 + $0x38] sm:$0xff]
    %v110 = vld [vmem:[%s2] sm:$0x3]
    %v112 = vlaneseq
    %v113 = vshrl.u32 %v112, 7
    %v114 = vsub.s32 0, %v113
    %v115 = vrot.slane %v110, %v114
    %v116 = vlaneseq
    %v117 = vshrl.u32 %v116, 7
    %v118 = vsub.s32 1, %v117
    %v119 = vrot.slane %v110, %v118
    %v130 = vunpack.c.l.b16 %v102
    %v131 = vunpack.c.h.b16 %v102
    %v132 = vunpack.c.l.b16 %v103
    %v133 = vunpack.c.h.b16 %v103
    %v134 = vunpack.c.l.b16 %v104
    %v135 = vunpack.c.h.b16 %v104
    %v136 = vunpack.c.l.b16 %v105
    %v137 = vunpack.c.h.b16 %v105
    %v138 = vunpack.c.l.b16 %v106
    %v139 = vunpack.c.h.b16 %v106
    %v140 = vunpack.c.l.b16 %v107
    %v141 = vunpack.c.h.b16 %v107
    %v142 = vunpack.c.l.b16 %v108
    %v143 = vunpack.c.h.b16 %v108
    %v144 = vunpack.c.l.b16 %v109
    %v145 = vunpack.c.h.b16 %v109
    %v146 = vpack.c.b16 %v132, %v130
    %v147 = vpack.c.b16 %v133, %v131
    %v148 = vpack.c.b16 %v136, %v134
    %v149 = vpack.c.b16 %v137, %v135
    %v150 = vpack.c.b16 %v140, %v138
    %v151 = vpack.c.b16 %v141, %v139
    %v152 = vpack.c.b16 %v144, %v142
    %v153 = vpack.c.b16 %v145, %v143
    %vm162 = vcmask 523264
    %v164 = vsel %vm162, %v101, 0
    %166 = vmatprep.subr.bf16.mxu0 0
    %167 = vmatpush1.bf16.msra.mxu0 0
    %168 = vmatprep.subr.bf16.mxu0 0
    %169 = vmatpush1.bf16.msra.mxu0 0
    %170 = vmatprep.subr.bf16.mxu0 0
    %171 = vmatpush1.bf16.msra.mxu0 0
    %172 = vmatprep.subr.bf16.mxu0 0
    %173 = vmatpush1.bf16.msra.mxu0 0
    %174 = vmatprep.subr.bf16.mxu0 %v153
    %175 = vmatpush1.bf16.msra.mxu0 %v152
    %176 = vmatprep.subr.bf16.mxu0 %v151
    %177 = vmatpush1.bf16.msra.mxu0 %v150
    %178 = vmatprep.subr.bf16.mxu0 %v149
    %179 = vmatpush1.bf16.msra.mxu0 %v148
    %180 = vmatprep.subr.bf16.mxu0 %v147
    %181 = vmatpush1.bf16.msra.mxu0 %v146
    %182 = vmatprep.subr.bf16.mxu0 0
    %183 = vmatpush2.bf16.msra.mxu0 0
    %184 = vmatprep.subr.bf16.mxu0 0
    %185 = vmatpush2.bf16.msra.mxu0 0
    %186 = vmatprep.subr.bf16.mxu0 0
    %187 = vmatpush2.bf16.msra.mxu0 0
    %188 = vmatprep.subr.bf16.mxu0 0
    %189 = vmatpush2.bf16.msra.mxu0 0
    %190 = vmatprep.subr.bf16.mxu0 0
    %191 = vmatpush2.bf16.msra.mxu0 0
    %192 = vmatprep.subr.bf16.mxu0 0
    %193 = vmatpush2.bf16.msra.mxu0 0
    %194 = vmatprep.subr.bf16.mxu0 0
    %195 = vmatpush2.bf16.msra.mxu0 0
    %196 = vmatprep.subr.bf16.mxu0 0
    %197 = vmatpush2.bf16.msra.mxu0 0
    %198 = vmatprep.mubr.bf16.mxu0 0
    %199 = vmatmul.mubr.bf16.gmra.mxu0 %v164
    %v200 = vpop.f32.mrf.mxu0
    %v201 = vadd.f32 %v115, %v200
    %v202 = vpop.f32.mrf.mxu0
    %v203 = vadd.f32 %v119, %v202
    %v204 = vpop.f32.mrf.mxu0
    %v205 = vpop.f32.mrf.mxu0
    %206 = vdwg.mxu0
    %v207 = vmax.f32 %v201, 0.0
    %v208 = vmax.f32 %v203, 0.0
    %v209 = vpack.c.bf16 %v207, %v207
    %v210 = vpack.c.bf16 %v208, %v208
    %v211 = vld [vmem:[#allocation7] sm:$0xff]
    %v212 = vld [vmem:[#allocation7 + $0x8] sm:$0xff]
    %v213 = vld [vmem:[#allocation7 + $0x10] sm:$0xff]
    %v214 = vld [vmem:[#allocation7 + $0x18] sm:$0xff]
    %v215 = vld [vmem:[#allocation7 + $0x20] sm:$0xff]
    %v216 = vld [vmem:[#allocation7 + $0x28] sm:$0xff]
    %v217 = vld [vmem:[#allocation7 + $0x30] sm:$0xff]
    %v218 = vld [vmem:[#allocation7 + $0x38] sm:$0xff]
    %v219 = vld [vmem:[#allocation7 + $0x40] sm:$0xff]
    %v220 = vld [vmem:[#allocation7 + $0x48] sm:$0xff]
    %v221 = vld [vmem:[#allocation7 + $0x50] sm:$0xff]
    %v222 = vld [vmem:[#allocation7 + $0x58] sm:$0xff]
    %v223 = vld [vmem:[#allocation7 + $0x60] sm:$0xff]
    %v224 = vld [vmem:[#allocation7 + $0x68] sm:$0xff]
    %v225 = vld [vmem:[#allocation7 + $0x70] sm:$0xff]
    %v226 = vld [vmem:[#allocation7 + $0x78] sm:$0xff]
    %v227 = vld [vmem:[#allocation7 + $0x80] sm:$0xff]
    %v228 = vld [vmem:[#allocation7 + $0x88] sm:$0xff]
    %v229 = vld [vmem:[#allocation7 + $0x90] sm:$0xff]
    %v230 = vld [vmem:[#allocation7 + $0x98] sm:$0xff]
    %v231 = vld [vmem:[#allocation7 + $0xa0] sm:$0xff]
    %v232 = vld [vmem:[#allocation7 + $0xa8] sm:$0xff]
    %v233 = vld [vmem:[#allocation7 + $0xb0] sm:$0xff]
    %v234 = vld [vmem:[#allocation7 + $0xb8] sm:$0xff]
    %v235 = vld [vmem:[#allocation7 + $0xc0] sm:$0xff]
    %v236 = vld [vmem:[#allocation7 + $0xc8] sm:$0xff]
    %v237 = vld [vmem:[#allocation7 + $0xd0] sm:$0xff]
    %v238 = vld [vmem:[#allocation7 + $0xd8] sm:$0xff]
    %v239 = vld [vmem:[#allocation7 + $0xe0] sm:$0xff]
    %v240 = vld [vmem:[#allocation7 + $0xe8] sm:$0xff]
    %v241 = vld [vmem:[#allocation7 + $0xf0] sm:$0xff]
    %v242 = vld [vmem:[#allocation7 + $0xf8] sm:$0xff]
    %v243 = vld [vmem:[%s4] sm:$0x3]
    %v245 = vlaneseq
    %v246 = vshrl.u32 %v245, 7
    %v247 = vsub.s32 0, %v246
    %v248 = vrot.slane %v243, %v247
    %v249 = vlaneseq
    %v250 = vshrl.u32 %v249, 7
    %v251 = vsub.s32 1, %v250
    %v252 = vrot.slane %v243, %v251
    %v287 = vunpack.c.l.b16 %v211
    %v288 = vunpack.c.h.b16 %v211
    %v289 = vunpack.c.l.b16 %v212
    %v290 = vunpack.c.h.b16 %v212
    %v291 = vunpack.c.l.b16 %v213
    %v292 = vunpack.c.h.b16 %v213
    %v293 = vunpack.c.l.b16 %v214
    %v294 = vunpack.c.h.b16 %v214
    %v295 = vunpack.c.l.b16 %v215
    %v296 = vunpack.c.h.b16 %v215
    %v297 = vunpack.c.l.b16 %v216
    %v298 = vunpack.c.h.b16 %v216
    %v299 = vunpack.c.l.b16 %v217
    %v300 = vunpack.c.h.b16 %v217
    %v301 = vunpack.c.l.b16 %v218
    %v302 = vunpack.c.h.b16 %v218
    %v303 = vunpack.c.l.b16 %v219
    %v304 = vunpack.c.h.b16 %v219
    %v305 = vunpack.c.l.b16 %v220
    %v306 = vunpack.c.h.b16 %v220
    %v307 = vunpack.c.l.b16 %v221
    %v308 = vunpack.c.h.b16 %v221
    %v309 = vunpack.c.l.b16 %v222
    %v310 = vunpack.c.h.b16 %v222
    %v311 = vunpack.c.l.b16 %v223
    %v312 = vunpack.c.h.b16 %v223
    %v313 = vunpack.c.l.b16 %v224
    %v314 = vunpack.c.h.b16 %v224
    %v315 = vunpack.c.l.b16 %v225
    %v316 = vunpack.c.h.b16 %v225
    %v317 = vunpack.c.l.b16 %v226
    %v318 = vunpack.c.h.b16 %v226
    %v319 = vunpack.c.l.b16 %v227
    %v320 = vunpack.c.h.b16 %v227
    %v321 = vunpack.c.l.b16 %v228
    %v322 = vunpack.c.h.b16 %v228
    %v323 = vunpack.c.l.b16 %v229
    %v324 = vunpack.c.h.b16 %v229
    %v325 = vunpack.c.l.b16 %v230
    %v326 = vunpack.c.h.b16 %v230
    %v327 = vunpack.c.l.b16 %v231
    %v328 = vunpack.c.h.b16 %v231
    %v329 = vunpack.c.l.b16 %v232
    %v330 = vunpack.c.h.b16 %v232
    %v331 = vunpack.c.l.b16 %v233
    %v332 = vunpack.c.h.b16 %v233
    %v333 = vunpack.c.l.b16 %v234
    %v334 = vunpack.c.h.b16 %v234
    %v335 = vunpack.c.l.b16 %v235
    %v336 = vunpack.c.h.b16 %v235
    %v337 = vunpack.c.l.b16 %v236
    %v338 = vunpack.c.h.b16 %v236
    %v339 = vunpack.c.l.b16 %v237
    %v340 = vunpack.c.h.b16 %v237
    %v341 = vunpack.c.l.b16 %v238
    %v342 = vunpack.c.h.b16 %v238
    %v343 = vunpack.c.l.b16 %v239
    %v344 = vunpack.c.h.b16 %v239
    %v345 = vunpack.c.l.b16 %v240
    %v346 = vunpack.c.h.b16 %v240
    %v347 = vunpack.c.l.b16 %v241
    %v348 = vunpack.c.h.b16 %v241
    %v349 = vunpack.c.l.b16 %v242
    %v350 = vunpack.c.h.b16 %v242
    %v351 = vpack.c.b16 %v289, %v287
    %v352 = vpack.c.b16 %v290, %v288
    %v353 = vpack.c.b16 %v293, %v291
    %v354 = vpack.c.b16 %v294, %v292
    %v355 = vpack.c.b16 %v297, %v295
    %v356 = vpack.c.b16 %v298, %v296
    %v357 = vpack.c.b16 %v301, %v299
    %v358 = vpack.c.b16 %v302, %v300
    %v359 = vpack.c.b16 %v305, %v303
    %v360 = vpack.c.b16 %v306, %v304
    %v361 = vpack.c.b16 %v309, %v307
    %v362 = vpack.c.b16 %v310, %v308
    %v363 = vpack.c.b16 %v313, %v311
    %v364 = vpack.c.b16 %v314, %v312
    %v365 = vpack.c.b16 %v317, %v315
    %v366 = vpack.c.b16 %v318, %v316
    %v367 = vpack.c.b16 %v321, %v319
    %v368 = vpack.c.b16 %v322, %v320
    %v369 = vpack.c.b16 %v325, %v323
    %v370 = vpack.c.b16 %v326, %v324
    %v371 = vpack.c.b16 %v329, %v327
    %v372 = vpack.c.b16 %v330, %v328
    %v373 = vpack.c.b16 %v333, %v331
    %v374 = vpack.c.b16 %v334, %v332
    %v375 = vpack.c.b16 %v337, %v335
    %v376 = vpack.c.b16 %v338, %v336
    %v377 = vpack.c.b16 %v341, %v339
    %v378 = vpack.c.b16 %v342, %v340
    %v379 = vpack.c.b16 %v345, %v343
    %v380 = vpack.c.b16 %v346, %v344
    %v381 = vpack.c.b16 %v349, %v347
    %v382 = vpack.c.b16 %v350, %v348
    %415 = vmatprep.subr.bf16.mxu0 %v366
    %416 = vmatpush1.bf16.msra.mxu0 %v365
    %417 = vmatprep.subr.bf16.mxu0 %v364
    %418 = vmatpush1.bf16.msra.mxu0 %v363
    %419 = vmatprep.subr.bf16.mxu0 %v362
    %420 = vmatpush1.bf16.msra.mxu0 %v361
    %421 = vmatprep.subr.bf16.mxu0 %v360
    %422 = vmatpush1.bf16.msra.mxu0 %v359
    %423 = vmatprep.subr.bf16.mxu0 %v358
    %424 = vmatpush1.bf16.msra.mxu0 %v357
    %425 = vmatprep.subr.bf16.mxu0 %v356
    %426 = vmatpush1.bf16.msra.mxu0 %v355
    %427 = vmatprep.subr.bf16.mxu0 %v354
    %428 = vmatpush1.bf16.msra.mxu0 %v353
    %429 = vmatprep.subr.bf16.mxu0 %v352
    %430 = vmatpush1.bf16.msra.mxu0 %v351
    %431 = vmatprep.subr.bf16.mxu0 %v382
    %432 = vmatpush2.bf16.msra.mxu0 %v381
    %433 = vmatprep.subr.bf16.mxu0 %v380
    %434 = vmatpush2.bf16.msra.mxu0 %v379
    %435 = vmatprep.subr.bf16.mxu0 %v378
    %436 = vmatpush2.bf16.msra.mxu0 %v377
    %437 = vmatprep.subr.bf16.mxu0 %v376
    %438 = vmatpush2.bf16.msra.mxu0 %v375
    %439 = vmatprep.subr.bf16.mxu0 %v374
    %440 = vmatpush2.bf16.msra.mxu0 %v373
    %441 = vmatprep.subr.bf16.mxu0 %v372
    %442 = vmatpush2.bf16.msra.mxu0 %v371
    %443 = vmatprep.subr.bf16.mxu0 %v370
    %444 = vmatpush2.bf16.msra.mxu0 %v369
    %445 = vmatprep.subr.bf16.mxu0 %v368
    %446 = vmatpush2.bf16.msra.mxu0 %v367
    %447 = vmatprep.mubr.bf16.mxu0 %v210
    %448 = vmatmul.mubr.bf16.gmra.mxu0 %v209
    %v449 = vpop.f32.mrf.mxu0
    %v450 = vadd.f32 %v248, %v449
    %v451 = vpop.f32.mrf.mxu0
    %v452 = vadd.f32 %v252, %v451
    %v453 = vpop.f32.mrf.mxu0
    %v454 = vpop.f32.mrf.mxu0
    %455 = vdwg.mxu0
    %v456 = vmax.f32 %v450, 0.0
    %v457 = vmax.f32 %v452, 0.0
    %v458 = vpack.c.bf16 %v456, %v456
    %v459 = vpack.c.bf16 %v457, %v457
    %v460 = vld [vmem:[#allocation8] sm:$0xf]
    %v461 = vld [vmem:[#allocation8 + $0x4] sm:$0xf]
    %v462 = vld [vmem:[#allocation8 + $0x8] sm:$0xf]
    %v463 = vld [vmem:[#allocation8 + $0xc] sm:$0xf]
    %v464 = vld [vmem:[#allocation8 + $0x10] sm:$0xf]
    %v465 = vld [vmem:[#allocation8 + $0x14] sm:$0xf]
    %v466 = vld [vmem:[#allocation8 + $0x18] sm:$0xf]
    %v467 = vld [vmem:[#allocation8 + $0x1c] sm:$0xf]
    %v468 = vld [vmem:[#allocation8 + $0x20] sm:$0xf]
    %v469 = vld [vmem:[#allocation8 + $0x24] sm:$0xf]
    %v470 = vld [vmem:[#allocation8 + $0x28] sm:$0xf]
    %v471 = vld [vmem:[#allocation8 + $0x2c] sm:$0xf]
    %v472 = vld [vmem:[#allocation8 + $0x30] sm:$0xf]
    %v473 = vld [vmem:[#allocation8 + $0x34] sm:$0xf]
    %v474 = vld [vmem:[#allocation8 + $0x38] sm:$0xf]
    %v475 = vld [vmem:[#allocation8 + $0x3c] sm:$0xf]
    %v476 = vld [vmem:[#allocation8 + $0x40] sm:$0xf]
    %v477 = vld [vmem:[#allocation8 + $0x44] sm:$0xf]
    %v478 = vld [vmem:[#allocation8 + $0x48] sm:$0xf]
    %v479 = vld [vmem:[#allocation8 + $0x4c] sm:$0xf]
    %v480 = vld [vmem:[#allocation8 + $0x50] sm:$0xf]
    %v481 = vld [vmem:[#allocation8 + $0x54] sm:$0xf]
    %v482 = vld [vmem:[#allocation8 + $0x58] sm:$0xf]
    %v483 = vld [vmem:[#allocation8 + $0x5c] sm:$0xf]
    %v484 = vld [vmem:[#allocation8 + $0x60] sm:$0xf]
    %v485 = vld [vmem:[#allocation8 + $0x64] sm:$0xf]
    %v486 = vld [vmem:[#allocation8 + $0x68] sm:$0xf]
    %v487 = vld [vmem:[#allocation8 + $0x6c] sm:$0xf]
    %v488 = vld [vmem:[#allocation8 + $0x70] sm:$0xf]
    %v489 = vld [vmem:[#allocation8 + $0x74] sm:$0xf]
    %v490 = vld [vmem:[#allocation8 + $0x78] sm:$0xf]
    %v491 = vld [vmem:[#allocation8 + $0x7c] sm:$0xf]
    %v492 = vld [vmem:[%s6] sm:$0x1]
    %v494 = vlaneseq
    %v495 = vshrl.u32 %v494, 7
    %v496 = vsub.s32 0, %v495
    %v497 = vrot.slane %v492, %v496
    %v531 = vunpack.c.l.b16 %v460
    %v532 = vunpack.c.l.b16 %v461
    %v533 = vunpack.c.l.b16 %v462
    %v534 = vunpack.c.l.b16 %v463
    %v535 = vunpack.c.l.b16 %v464
    %v536 = vunpack.c.l.b16 %v465
    %v537 = vunpack.c.l.b16 %v466
    %v538 = vunpack.c.l.b16 %v467
    %v539 = vunpack.c.l.b16 %v468
    %v540 = vunpack.c.l.b16 %v469
    %v541 = vunpack.c.l.b16 %v470
    %v542 = vunpack.c.l.b16 %v471
    %v543 = vunpack.c.l.b16 %v472
    %v544 = vunpack.c.l.b16 %v473
    %v545 = vunpack.c.l.b16 %v474
    %v546 = vunpack.c.l.b16 %v475
    %v547 = vunpack.c.l.b16 %v476
    %v548 = vunpack.c.l.b16 %v477
    %v549 = vunpack.c.l.b16 %v478
    %v550 = vunpack.c.l.b16 %v479
    %v551 = vunpack.c.l.b16 %v480
    %v552 = vunpack.c.l.b16 %v481
    %v553 = vunpack.c.l.b16 %v482
    %v554 = vunpack.c.l.b16 %v483
    %v555 = vunpack.c.l.b16 %v484
    %v556 = vunpack.c.l.b16 %v485
    %v557 = vunpack.c.l.b16 %v486
    %v558 = vunpack.c.l.b16 %v487
    %v559 = vunpack.c.l.b16 %v488
    %v560 = vunpack.c.l.b16 %v489
    %v561 = vunpack.c.l.b16 %v490
    %v562 = vunpack.c.l.b16 %v491
    %v563 = vpack.c.b16 %v532, %v531
    %v564 = vpack.c.b16 %v534, %v533
    %v565 = vpack.c.b16 %v536, %v535
    %v566 = vpack.c.b16 %v538, %v537
    %v567 = vpack.c.b16 %v540, %v539
    %v568 = vpack.c.b16 %v542, %v541
    %v569 = vpack.c.b16 %v544, %v543
    %v570 = vpack.c.b16 %v546, %v545
    %v571 = vpack.c.b16 %v548, %v547
    %v572 = vpack.c.b16 %v550, %v549
    %v573 = vpack.c.b16 %v552, %v551
    %v574 = vpack.c.b16 %v554, %v553
    %v575 = vpack.c.b16 %v556, %v555
    %v576 = vpack.c.b16 %v558, %v557
    %v577 = vpack.c.b16 %v560, %v559
    %v578 = vpack.c.b16 %v562, %v561
    %595 = vmatprep.subr.bf16.mxu0 0
    %596 = vmatpush1.bf16.msra.mxu0 %v570
    %597 = vmatprep.subr.bf16.mxu0 0
    %598 = vmatpush1.bf16.msra.mxu0 %v569
    %599 = vmatprep.subr.bf16.mxu0 0
    %600 = vmatpush1.bf16.msra.mxu0 %v568
    %601 = vmatprep.subr.bf16.mxu0 0
    %602 = vmatpush1.bf16.msra.mxu0 %v567
    %603 = vmatprep.subr.bf16.mxu0 0
    %604 = vmatpush1.bf16.msra.mxu0 %v566
    %605 = vmatprep.subr.bf16.mxu0 0
    %606 = vmatpush1.bf16.msra.mxu0 %v565
    %607 = vmatprep.subr.bf16.mxu0 0
    %608 = vmatpush1.bf16.msra.mxu0 %v564
    %609 = vmatprep.subr.bf16.mxu0 0
    %610 = vmatpush1.bf16.msra.mxu0 %v563
    %611 = vmatprep.subr.bf16.mxu0 0
    %612 = vmatpush2.bf16.msra.mxu0 %v578
    %613 = vmatprep.subr.bf16.mxu0 0
    %614 = vmatpush2.bf16.msra.mxu0 %v577
    %615 = vmatprep.subr.bf16.mxu0 0
    %616 = vmatpush2.bf16.msra.mxu0 %v576
    %617 = vmatprep.subr.bf16.mxu0 0
    %618 = vmatpush2.bf16.msra.mxu0 %v575
    %619 = vmatprep.subr.bf16.mxu0 0
    %620 = vmatpush2.bf16.msra.mxu0 %v574
    %621 = vmatprep.subr.bf16.mxu0 0
    %622 = vmatpush2.bf16.msra.mxu0 %v573
    %623 = vmatprep.subr.bf16.mxu0 0
    %624 = vmatpush2.bf16.msra.mxu0 %v572
    %625 = vmatprep.subr.bf16.mxu0 0
    %626 = vmatpush2.bf16.msra.mxu0 %v571
    %627 = vmatprep.mubr.bf16.mxu0 %v459
    %628 = vmatmul.mubr.bf16.gmra.mxu0 %v458
    %v629 = vpop.f32.mrf.mxu0
    %v630 = vadd.f32 %v497, %v629
    %v631 = vpop.f32.mrf.mxu0
    %v632 = vpop.f32.mrf.mxu0
    %v633 = vpop.f32.mrf.mxu0
    %634 = vdwg.mxu0
    %v635 = vmax.f32 %v630, 0.0
    %v636 = vpack.c.bf16 %v635, %v635
    %v637 = vld [vmem:[#allocation10] sm:$0xf]
    %v638 = vld [vmem:[#allocation10 + $0x4] sm:$0xf]
    %v639 = vld [vmem:[#allocation10 + $0x8] sm:$0xf]
    %v640 = vld [vmem:[#allocation10 + $0xc] sm:$0xf]
    %v641 = vld [vmem:[#allocation10 + $0x10] sm:$0xf]
    %v642 = vld [vmem:[#allocation10 + $0x14] sm:$0xf]
    %v643 = vld [vmem:[#allocation10 + $0x18] sm:$0xf]
    %v644 = vld [vmem:[#allocation10 + $0x1c] sm:$0xf]
    %v645 = vld [vmem:[#allocation10 + $0x20] sm:$0xf]
    %v646 = vld [vmem:[#allocation10 + $0x24] sm:$0xf]
    %v647 = vld [vmem:[#allocation10 + $0x28] sm:$0xf]
    %v648 = vld [vmem:[#allocation10 + $0x2c] sm:$0xf]
    %v649 = vld [vmem:[#allocation10 + $0x30] sm:$0xf]
    %v650 = vld [vmem:[#allocation10 + $0x34] sm:$0xf]
    %v651 = vld [vmem:[#allocation10 + $0x38] sm:$0xf]
    %v652 = vld [vmem:[#allocation10 + $0x3c] sm:$0xf]
    %v653 = vld [vmem:[%s8] sm:$0x1]
    %v655 = vlaneseq
    %v656 = vshrl.u32 %v655, 7
    %v657 = vsub.s32 0, %v656
    %v658 = vrot.slane %v653, %v657
    %v676 = vunpack.c.l.b16 %v637
    %v677 = vunpack.c.l.b16 %v638
    %v678 = vunpack.c.l.b16 %v639
    %v679 = vunpack.c.l.b16 %v640
    %v680 = vunpack.c.l.b16 %v641
    %v681 = vunpack.c.l.b16 %v642
    %v682 = vunpack.c.l.b16 %v643
    %v683 = vunpack.c.l.b16 %v644
    %v684 = vunpack.c.l.b16 %v645
    %v685 = vunpack.c.l.b16 %v646
    %v686 = vunpack.c.l.b16 %v647
    %v687 = vunpack.c.l.b16 %v648
    %v688 = vunpack.c.l.b16 %v649
    %v689 = vunpack.c.l.b16 %v650
    %v690 = vunpack.c.l.b16 %v651
    %v691 = vunpack.c.l.b16 %v652
    %v692 = vpack.c.b16 %v677, %v676
    %v693 = vpack.c.b16 %v679, %v678
    %v694 = vpack.c.b16 %v681, %v680
    %v695 = vpack.c.b16 %v683, %v682
    %v696 = vpack.c.b16 %v685, %v684
    %v697 = vpack.c.b16 %v687, %v686
    %v698 = vpack.c.b16 %v689, %v688
    %v699 = vpack.c.b16 %v691, %v690
    %708 = vmatprep.subr.bf16.mxu0 0
    %709 = vmatpush1.bf16.msra.mxu0 %v699
    %710 = vmatprep.subr.bf16.mxu0 0
    %711 = vmatpush1.bf16.msra.mxu0 %v698
    %712 = vmatprep.subr.bf16.mxu0 0
    %713 = vmatpush1.bf16.msra.mxu0 %v697
    %714 = vmatprep.subr.bf16.mxu0 0
    %715 = vmatpush1.bf16.msra.mxu0 %v696
    %716 = vmatprep.subr.bf16.mxu0 0
    %717 = vmatpush1.bf16.msra.mxu0 %v695
    %718 = vmatprep.subr.bf16.mxu0 0
    %719 = vmatpush1.bf16.msra.mxu0 %v694
    %720 = vmatprep.subr.bf16.mxu0 0
    %721 = vmatpush1.bf16.msra.mxu0 %v693
    %722 = vmatprep.subr.bf16.mxu0 0
    %723 = vmatpush1.bf16.msra.mxu0 %v692
    %724 = vmatprep.subr.bf16.mxu0 0
    %725 = vmatpush2.bf16.msra.mxu0 0
    %726 = vmatprep.subr.bf16.mxu0 0
    %727 = vmatpush2.bf16.msra.mxu0 0
    %728 = vmatprep.subr.bf16.mxu0 0
    %729 = vmatpush2.bf16.msra.mxu0 0
    %730 = vmatprep.subr.bf16.mxu0 0
    %731 = vmatpush2.bf16.msra.mxu0 0
    %732 = vmatprep.subr.bf16.mxu0 0
    %733 = vmatpush2.bf16.msra.mxu0 0
    %734 = vmatprep.subr.bf16.mxu0 0
    %735 = vmatpush2.bf16.msra.mxu0 0
    %736 = vmatprep.subr.bf16.mxu0 0
    %737 = vmatpush2.bf16.msra.mxu0 0
    %738 = vmatprep.subr.bf16.mxu0 0
    %739 = vmatpush2.bf16.msra.mxu0 0
    %740 = vmatprep.mubr.bf16.mxu0 0
    %741 = vmatmul.mubr.bf16.gmra.mxu0 %v636
    %v742 = vpop.f32.mrf.mxu0
    %v743 = vadd.f32 %v658, %v742
    %v744 = vpop.f32.mrf.mxu0
    %v745 = vpop.f32.mrf.mxu0
    %v746 = vpop.f32.mrf.mxu0
    %747 = vdwg.mxu0
    %748 = vmax.xlane.f32.xlu0 %v743
    %v749 = vpop.xlane.xlu0 %748
    %v750 = vsub.f32 %v743, %v749
    %v751 = vmul.f32 %v750, 1.442695
    %v752 = vpow.pop %v751
    %753 = vadd.xlane.f32.xlu0 %v752
    %v754 = vpop.xlane.xlu0 %753
    %v755 = vrcp.pop %v754
    %v756 = vmul.f32 %v754, %v755
    %v757 = vsub.f32 2.0, %v756
    %v758 = vmul.f32 %v755, %v757
    %v759 = vmul.f32 %v752, %v758
    %760 = vst [vmem:[#allocation11] sm:$0xff] %v759
    // Predicated region
    $region58: #{tpu_custom_call.1} parent=1 // pred_check
      _
    $region59: #{tpu_custom_call.1} parent=1 // pred_check_branch
      %762 = sbr.rel (0) target = $region61
    $region60: #{tpu_custom_call.1} parent=1 // pred_region
      %s764 = ssub.s32 128, 128
      %765 = vsyncadd [#allocation4], %s764
      %s767 = sshll.u32 [#allocation11], 4
      %s768 = int_to_ptr.vmem [resolvable:$true] %s767
      %770 = dma.vmem_to_hbm [thread:$0]  %s768, 128, %s9, [#allocation4]
    $region61: #{tpu_custom_call.1} parent=1 // pred_fallthru
      _
    // Predicated region
    $region62: #{tpu_custom_call.1} parent=1 // pred_check
      _
    $region63: #{tpu_custom_call.1} parent=1 // pred_check_branch
      %772 = sbr.rel (0) target = $region65
    $region64: #{tpu_custom_call.1} parent=1 // pred_region
      %773 = dma.done [#allocation4], 128
    $region65: #{tpu_custom_call.1} parent=1 // pred_fallthru
      _
    %774 = vsyncpa [#allocation3], 1
    %775 = vsyncpa [#allocation6], 1
    %776 = vsyncpa [#allocation9], 1
    %777 = vsyncpa [#allocation4], 1

</llo_original>
